<compile_context>
chip_gen: v6e
topology: v6e:2x2x1
jax: 0.10.0
libtpu: 0.0.40
codegen_flags: <defaults>
</compile_context>

<pallas_src>
import functools

import numpy as np
import jax
import jax.numpy as jnp
from jax.experimental import pallas as pl
from jax.experimental.pallas import tpu as pltpu

DELTA = 1e-6
LOG100 = float(np.log(100.0))
INV = float(np.log(np.exp(1.0 - DELTA) - 1.0))
LOG_1M_DELTA = float(np.log(1.0 - DELTA))


# ---------- math helpers (usable both inside the kernel and in the JAX ref) ----------
def _softplus(x):
    # numerically-stable F.softplus
    return jnp.maximum(x, 0.0) + jnp.log(1.0 + jnp.exp(-jnp.abs(x)))


def _log(x):
    # module's `log`: torch.log(x * 100.) - np.log(100.)
    return jnp.log(x * 100.0) - LOG100


def _logsigmoid(x):
    # module's `logsigmoid`: -(softplus(x) + delta) applied to -x
    return -(_softplus(-x) + DELTA)


def _softmax_last(x):
    e = jnp.exp(x - jnp.max(x, axis=-1, keepdims=True))
    return e / jnp.sum(e, axis=-1, keepdims=True)


def _log_softmax_last(x):
    m = jnp.max(x, axis=-1, keepdims=True)
    return x - (jnp.log(jnp.sum(jnp.exp(x - m), axis=-1, keepdims=True)) + m)


# --------------------------------- Pallas kernel ---------------------------------
def dsf_kernel(ds_ref, x_ref, u_ref, w_ref, out_ref, *, H, I, O):
    # Row (N) axis is the lane axis of every tile below.
    a = _softplus(ds_ref[0:H, :] + INV)                  # (H, Nb)
    b = ds_ref[H:2 * H, :]                               # (H, Nb)
    dw = ds_ref[2 * H:3 * H, :]                          # (H, Nb)

    # ---- u-softmax folded into ux = sum_i u[:, i] * x[i]
    # Unrolled over I with H on sublanes (fully packed (H, Nb) vregs).
    if I == 1:
        # softmax over a single element == 1 -> skip it entirely.
        ux = x_ref[0:1, :]                               # (1, Nb), broadcasts vs a
    else:
        pre_u = [u_ref[i] + ds_ref[3 * H + i:3 * H + i + 1, :]  # (H,1)+(1,Nb)->(H,Nb)
                 for i in range(I)]
        mu = pre_u[0]
        for i in range(1, I):
            mu = jnp.maximum(mu, pre_u[i])
        su = None
        sux = None
        for i in range(I):
            e = jnp.exp(pre_u[i] - mu)                   # (H, Nb)
            xi = x_ref[i:i + 1, :]                       # (1, Nb)
            su = e if su is None else su + e
            sux = e * xi if sux is None else sux + e * xi
        ux = sux / su                                    # (H, Nb) = sum_i u_i * x_i

    pre_sigm = a * ux + b                                # (H, Nb)

    # ---- shared-transcendental sigmoid / softplus block (1 exp + 1 log + 1 div)
    abs_ps = jnp.abs(pre_sigm)
    t = jnp.exp(-abs_ps)                                 # (H, Nb)
    lp = jnp.log(1.0 + t)                                # log1p(exp(-|ps|))
    inv1pt = 1.0 / (1.0 + t)
    sigm = jnp.where(pre_sigm >= 0.0, inv1pt, 1.0 - inv1pt)     # sigmoid(pre_sigm)
    # logsigmoid(ps) + logsigmoid(-ps) = -(|ps| + 2*log1p(exp(-|ps|)) + 2*delta)
    hterm = _log(a) - (abs_ps + 2.0 * lp + 2.0 * DELTA)  # (H, Nb)

    # ---- w softmax over hidden; a single exp block reused by both outputs.
    pre_w = w_ref[...] + dw[None, :, :]                  # (O, H, Nb)
    mw = jnp.max(pre_w, axis=1, keepdims=True)
    ew = jnp.exp(pre_w - mw)
    w = ew * (1.0 / jnp.sum(ew, axis=1, keepdims=True))  # softmax(pre_w)

    x_pre = jnp.sum(w * sigm[None, :, :], axis=1)        # (O, Nb)
    x_pre_clipped = x_pre * (1.0 - DELTA) + DELTA * 0.5
    logx = _log(x_pre_clipped)
    log1mx = _log(1.0 - x_pre_clipped)
    xnew = logx - log1mx                                 # (O, Nb)

    # ---- logdet (incoming logdet == None): the in_dim logsumexp collapses
    # exactly (softmax u sums to 1), so logdet = lse_h(log w + hterm) + base.
    # Reuse w:  lse_h = mh + log(sum_h w * exp(hterm - mh))  -> only H exps.
    mh = jnp.max(hterm, axis=0, keepdims=True)           # (1, Nb)
    eh = jnp.exp(hterm - mh)                             # (H, Nb)
    s = jnp.sum(w * eh[None, :, :], axis=1)              # (O, Nb)
    logdet = mh + jnp.log(s) + (LOG_1M_DELTA - (logx + log1mx))  # (O, Nb)

    # single contiguous lane-dense slab writeback
    out_ref[...] = jnp.concatenate([xnew, logdet], axis=0)      # (2*O, Nb)


# ---------------------------------- wrapper ----------------------------------
def _round_up(v, m):
    return ((v + m - 1) // m) * m


def dense_sigmoid_flow(x, dsparams, u_param, w_param, *,
                       hidden_dim, in_dim, out_dim, block_n=2048):
    # TODO(synk): chained (non-None) incoming `logdet` not supported in-kernel;
    #             this implements the logdet=None branch (zeros(B, D, 1, 1)).
    if x.ndim == 2:
        x = x[..., None]
    H, I, O = hidden_dim, in_dim, out_dim
    B, D, _ = x.shape
    P = 3 * H + I
    assert dsparams.shape == (B, D, P)

    N = B * D
    N_pad = _round_up(N, 128)
    # Cap the block so the 1-D "parallel" grid keeps >= ~8 steps when the data
    # allows (v7x: both TensorCores; everyone: pipeline overlap); 2048 default
    # amortises the ~0.35us per-step overhead and stays well inside the v7x
    # 32 MiB scoped-VMEM budget with the (H, Nb)-sized temporaries.
    max_blk = max(128, _round_up((N_pad + 7) // 8, 128))
    blk = max(128, min(_round_up(block_n, 128), max_blk))
    N_pad = _round_up(N_pad, blk)

    # TODO(synk): lane-dense (feature-major) layout is still produced by a host-side
    #             transpose/pad pass; fusing it via an in-kernel transpose of the
    #             (blk, 3H+I) tile was judged too lowering-fragile for this drop.
    ds2 = dsparams.reshape(N, P).astype(jnp.float32)
    x2 = x.reshape(N, I).astype(jnp.float32)
    pad = N_pad - N
    if pad:
        ds2 = jnp.pad(ds2, ((0, pad), (0, 0)))   # zero rows are numerically safe
        x2 = jnp.pad(x2, ((0, pad), (0, 0)))
    ds_t = ds2.T                                  # (P, N_pad)  lane-dense rows
    x_t = x2.T                                    # (I, N_pad)
    u3 = u_param.astype(jnp.float32).T.reshape(I, H, 1)   # in_dim leading (unrolled)
    w3 = w_param.astype(jnp.float32).reshape(O, H, 1)

    kernel = functools.partial(dsf_kernel, H=H, I=I, O=O)

    # Advisory cost hint: kernel is transcendental (EUP) bound.
    transc = N_pad * (6 * H + O * H + (I * H if I > 1 else 0) + 3 * O)
    flops = N_pad * (14 * H + 4 * I * H + 8 * O * H + 12 * O)
    bytes_accessed = 4 * (N_pad * (P + I + 2 * O) + H * I + O * H)
    ce = pl.CostEstimate(flops=int(flops), transcendentals=int(transc),
                         bytes_accessed=int(bytes_accessed))

    out = pl.pallas_call(
        kernel,
        out_shape=jax.ShapeDtypeStruct((2 * O, N_pad), jnp.float32),
        grid_spec=pltpu.PrefetchScalarGridSpec(
            num_scalar_prefetch=0,
            grid=(N_pad // blk,),
            in_specs=[
                pl.BlockSpec((P, blk), lambda n: (0, n)),     # dsparams cols
                pl.BlockSpec((I, blk), lambda n: (0, n)),     # x cols
                pl.BlockSpec((I, H, 1), lambda n: (0, 0, 0)),  # u_ (whole)
                pl.BlockSpec((O, H, 1), lambda n: (0, 0, 0)),  # w_ (whole)
            ],
            out_specs=pl.BlockSpec((2 * O, blk), lambda n: (0, n)),
        ),
        compiler_params=pltpu.CompilerParams(
            dimension_semantics=("parallel",)),
        cost_estimate=ce,
    )(ds_t, x_t, u3, w3)

    xnew = out[0:O, :N].T.reshape(B, D, O)
    logdet = out[O:2 * O, :N].T.reshape(B, D, O, 1)
    if O == 1:                       # mimic torch .squeeze(-1)
        xnew = xnew[..., 0]
    return xnew, logdet


# ----------------------------- pure-JAX reference -----------------------------
def dsf_reference(x, dsparams, u_param, w_param, *, hidden_dim, in_dim, out_dim):
    if x.ndim == 2:
        x = x[..., None]
    H, I, O = hidden_dim, in_dim, out_dim
    pre_u = u_param[None, None] + dsparams[:, :, -I:][:, :, None, :]          # (B,D,H,I)
    pre_w = w_param[None, None] + dsparams[:, :, 2 * H:3 * H][:, :, None, :]  # (B,D,O,H)
    a = _softplus(dsparams[:, :, 0:H] + INV)
    b = dsparams[:, :, H:2 * H]
    w = _softmax_last(pre_w)
    u = _softmax_last(pre_u)
    pre_sigm = jnp.sum(u * a[:, :, :, None] * x[:, :, None, :], axis=3) + b
    sigm = 1.0 / (1.0 + jnp.exp(-pre_sigm))
    x_pre = jnp.sum(w * sigm[:, :, None, :], axis=3)
    x_pre_clipped = x_pre * (1.0 - DELTA) + DELTA * 0.5
    xnew = _log(x_pre_clipped) - _log(1.0 - x_pre_clipped)
    logj = (_log_softmax_last(pre_w)
            + _logsigmoid(pre_sigm[:, :, None, :])
            + _logsigmoid(-pre_sigm[:, :, None, :])
            + _log(a)[:, :, None, :])
    logj = logj[:, :, :, :, None] + _log_softmax_last(pre_u)[:, :, None, :, :]
    logj = jax.scipy.special.logsumexp(logj, axis=3)                          # (B,D,O,I)
    logdet_ = logj + LOG_1M_DELTA - (_log(x_pre_clipped) + _log(1.0 - x_pre_clipped))[:, :, :, None]
    logdet = jax.scipy.special.logsumexp(logdet_[:, :, :, :, None], axis=3)   # (B,D,O,1)
    if O == 1:
        xnew = xnew[..., 0]
    return xnew, logdet


# ------------------------------------ main ------------------------------------
if __name__ == "__main__":
    def _run_case(key, B, D, in_dim, hidden_dim, out_dim, block_n):
        k1, k2, k3, k4 = jax.random.split(key, 4)
        x = jax.random.normal(k1, (B, D, in_dim), dtype=jnp.float32)
        dsparams = 0.1 * jax.random.normal(
            k2, (B, D, 3 * hidden_dim + in_dim), dtype=jnp.float32)
        # parameters as in reset_parameters(): uniform(-0.001, 0.001)
        u_param = jax.random.uniform(k3, (hidden_dim, in_dim),
                                     minval=-0.001, maxval=0.001, dtype=jnp.float32)
        w_param = jax.random.uniform(k4, (out_dim, hidden_dim),
                                     minval=-0.001, maxval=0.001, dtype=jnp.float32)

        xnew, logdet = dense_sigmoid_flow(
            x, dsparams, u_param, w_param,
            hidden_dim=hidden_dim, in_dim=in_dim, out_dim=out_dim,
            block_n=block_n)
        jax.block_until_ready((xnew, logdet))

        xnew_ref, logdet_ref = dsf_reference(
            x, dsparams, u_param, w_param,
            hidden_dim=hidden_dim, in_dim=in_dim, out_dim=out_dim)

        exp_xnew_shape = (B, D) if out_dim == 1 else (B, D, out_dim)
        assert xnew.shape == exp_xnew_shape
        assert logdet.shape == (B, D, out_dim, 1)
        np.testing.assert_allclose(np.asarray(xnew), np.asarray(xnew_ref),
                                   rtol=2e-4, atol=2e-5)
        np.testing.assert_allclose(np.asarray(logdet), np.asarray(logdet_ref),
                                   rtol=2e-4, atol=2e-5)

    key = jax.random.PRNGKey(0)
    k_a, k_b, k_c = jax.random.split(key, 3)
    # small case matching the module's typical multi-feature use (I > 1 path)
    _run_case(k_a, B=2, D=8, in_dim=4, hidden_dim=16, out_dim=4, block_n=2048)
    # multi-block grid + row padding + I == 1 fast path + out_dim == 1 squeeze
    _run_case(k_b, B=2, D=160, in_dim=1, hidden_dim=8, out_dim=1, block_n=128)
    # I == 1 fast path with out_dim > 1 (no squeeze), single-step grid
    _run_case(k_c, B=1, D=64, in_dim=1, hidden_dim=16, out_dim=2, block_n=2048)
    print("KERNEL_OK")
</pallas_src>

<mosaic_0001>
module attributes {stable_mosaic.version = 11 : i64} {
  func.func @dsf_kernel(%arg0: i32, %arg1: memref<52x128xf32, #tpu.memory_space<vmem>>, %arg2: memref<4x128xf32, #tpu.memory_space<vmem>>, %arg3: memref<4x16x1xf32, #tpu.memory_space<vmem>>, %arg4: memref<4x16x1xf32, #tpu.memory_space<vmem>>, %arg5: memref<8x128xf32, #tpu.memory_space<vmem>>) attributes {dimension_semantics = [#tpu.dimension_semantics<parallel>], iteration_bounds = array<i64: 1>, scalar_prefetch = 0 : i64, scratch_operands = 0 : i64, tpu.core_type = #tpu.core_type<tc>, window_params = [{transform_indices = @transform_0, window_bounds = array<i64: 52, 128>}, {transform_indices = @transform_1, window_bounds = array<i64: 4, 128>}, {pipeline_mode = #tpu.pipeline_mode<synchronous>, transform_indices = @transform_2, window_bounds = array<i64: 4, 16, 1>}, {pipeline_mode = #tpu.pipeline_mode<synchronous>, transform_indices = @transform_3, window_bounds = array<i64: 4, 16, 1>}, {transform_indices = @transform_4, window_bounds = array<i64: 8, 128>}]} {
    %c0 = arith.constant 0 : index
    %c0_0 = arith.constant 0 : index
    %0 = vector.load %arg1[%c0, %c0_0] : memref<52x128xf32, #tpu.memory_space<vmem>>, vector<16x128xf32>
    %cst = arith.constant 0.541323245 : f32
    %1 = vector.broadcast %cst : f32 to vector<16x128xf32>
    %2 = arith.addf %0, %1 : vector<16x128xf32>
    %cst_1 = arith.constant 0.000000e+00 : f32
    %3 = vector.broadcast %cst_1 : f32 to vector<16x128xf32>
    %4 = arith.maximumf %2, %3 : vector<16x128xf32>
    %5 = math.absf %2 : vector<16x128xf32>
    %cst_2 = arith.constant 0.000000e+00 : f32
    %6 = vector.broadcast %cst_2 : f32 to vector<16x128xf32>
    %7 = arith.subf %6, %5 : vector<16x128xf32>
    %8 = math.exp %7 : vector<16x128xf32>
    %cst_3 = arith.constant 1.000000e+00 : f32
    %9 = vector.broadcast %cst_3 : f32 to vector<16x128xf32>
    %10 = arith.addf %9, %8 : vector<16x128xf32>
    %11 = math.log %10 : vector<16x128xf32>
    %12 = arith.addf %4, %11 : vector<16x128xf32>
    %c16 = arith.constant 16 : index
    %c0_4 = arith.constant 0 : index
    %13 = vector.load %arg1[%c16, %c0_4] : memref<52x128xf32, #tpu.memory_space<vmem>>, vector<16x128xf32>
    %c32 = arith.constant 32 : index
    %c0_5 = arith.constant 0 : index
    %14 = vector.load %arg1[%c32, %c0_5] : memref<52x128xf32, #tpu.memory_space<vmem>>, vector<16x128xf32>
    %c0_6 = arith.constant 0 : index
    %c0_7 = arith.constant 0 : index
    %c0_8 = arith.constant 0 : index
    %15 = vector.load %arg3[%c0_6, %c0_7, %c0_8] : memref<4x16x1xf32, #tpu.memory_space<vmem>>, vector<1x16x1xf32>
    %16 = vector.shape_cast %15 : vector<1x16x1xf32> to vector<16x1xf32>
    %c48 = arith.constant 48 : index
    %c0_9 = arith.constant 0 : index
    %17 = vector.load %arg1[%c48, %c0_9] : memref<52x128xf32, #tpu.memory_space<vmem>>, vector<1x128xf32>
    %18 = vector.broadcast %16 : vector<16x1xf32> to vector<16x128xf32>
    %19 = vector.broadcast %17 : vector<1x128xf32> to vector<16x128xf32>
    %20 = arith.addf %18, %19 : vector<16x128xf32>
    %c1 = arith.constant 1 : index
    %c0_10 = arith.constant 0 : index
    %c0_11 = arith.constant 0 : index
    %21 = vector.load %arg3[%c1, %c0_10, %c0_11] : memref<4x16x1xf32, #tpu.memory_space<vmem>>, vector<1x16x1xf32>
    %22 = vector.shape_cast %21 : vector<1x16x1xf32> to vector<16x1xf32>
    %c49 = arith.constant 49 : index
    %c0_12 = arith.constant 0 : index
    %23 = vector.load %arg1[%c49, %c0_12] : memref<52x128xf32, #tpu.memory_space<vmem>>, vector<1x128xf32>
    %24 = vector.broadcast %22 : vector<16x1xf32> to vector<16x128xf32>
    %25 = vector.broadcast %23 : vector<1x128xf32> to vector<16x128xf32>
    %26 = arith.addf %24, %25 : vector<16x128xf32>
    %c2 = arith.constant 2 : index
    %c0_13 = arith.constant 0 : index
    %c0_14 = arith.constant 0 : index
    %27 = vector.load %arg3[%c2, %c0_13, %c0_14] : memref<4x16x1xf32, #tpu.memory_space<vmem>>, vector<1x16x1xf32>
    %28 = vector.shape_cast %27 : vector<1x16x1xf32> to vector<16x1xf32>
    %c50 = arith.constant 50 : index
    %c0_15 = arith.constant 0 : index
    %29 = vector.load %arg1[%c50, %c0_15] : memref<52x128xf32, #tpu.memory_space<vmem>>, vector<1x128xf32>
    %30 = vector.broadcast %28 : vector<16x1xf32> to vector<16x128xf32>
    %31 = vector.broadcast %29 : vector<1x128xf32> to vector<16x128xf32>
    %32 = arith.addf %30, %31 : vector<16x128xf32>
    %c3 = arith.constant 3 : index
    %c0_16 = arith.constant 0 : index
    %c0_17 = arith.constant 0 : index
    %33 = vector.load %arg3[%c3, %c0_16, %c0_17] : memref<4x16x1xf32, #tpu.memory_space<vmem>>, vector<1x16x1xf32>
    %34 = vector.shape_cast %33 : vector<1x16x1xf32> to vector<16x1xf32>
    %c51 = arith.constant 51 : index
    %c0_18 = arith.constant 0 : index
    %35 = vector.load %arg1[%c51, %c0_18] : memref<52x128xf32, #tpu.memory_space<vmem>>, vector<1x128xf32>
    %36 = vector.broadcast %34 : vector<16x1xf32> to vector<16x128xf32>
    %37 = vector.broadcast %35 : vector<1x128xf32> to vector<16x128xf32>
    %38 = arith.addf %36, %37 : vector<16x128xf32>
    %39 = arith.maximumf %20, %26 : vector<16x128xf32>
    %40 = arith.maximumf %39, %32 : vector<16x128xf32>
    %41 = arith.maximumf %40, %38 : vector<16x128xf32>
    %42 = arith.subf %20, %41 : vector<16x128xf32>
    %43 = math.exp %42 : vector<16x128xf32>
    %c0_19 = arith.constant 0 : index
    %c0_20 = arith.constant 0 : index
    %44 = vector.load %arg2[%c0_19, %c0_20] : memref<4x128xf32, #tpu.memory_space<vmem>>, vector<1x128xf32>
    %45 = vector.broadcast %44 : vector<1x128xf32> to vector<16x128xf32>
    %46 = arith.mulf %43, %45 : vector<16x128xf32>
    %47 = arith.subf %26, %41 : vector<16x128xf32>
    %48 = math.exp %47 : vector<16x128xf32>
    %c1_21 = arith.constant 1 : index
    %c0_22 = arith.constant 0 : index
    %49 = vector.load %arg2[%c1_21, %c0_22] : memref<4x128xf32, #tpu.memory_space<vmem>>, vector<1x128xf32>
    %50 = arith.addf %43, %48 : vector<16x128xf32>
    %51 = vector.broadcast %49 : vector<1x128xf32> to vector<16x128xf32>
    %52 = arith.mulf %48, %51 : vector<16x128xf32>
    %53 = arith.addf %46, %52 : vector<16x128xf32>
    %54 = arith.subf %32, %41 : vector<16x128xf32>
    %55 = math.exp %54 : vector<16x128xf32>
    %c2_23 = arith.constant 2 : index
    %c0_24 = arith.constant 0 : index
    %56 = vector.load %arg2[%c2_23, %c0_24] : memref<4x128xf32, #tpu.memory_space<vmem>>, vector<1x128xf32>
    %57 = arith.addf %50, %55 : vector<16x128xf32>
    %58 = vector.broadcast %56 : vector<1x128xf32> to vector<16x128xf32>
    %59 = arith.mulf %55, %58 : vector<16x128xf32>
    %60 = arith.addf %53, %59 : vector<16x128xf32>
    %61 = arith.subf %38, %41 : vector<16x128xf32>
    %62 = math.exp %61 : vector<16x128xf32>
    %c3_25 = arith.constant 3 : index
    %c0_26 = arith.constant 0 : index
    %63 = vector.load %arg2[%c3_25, %c0_26] : memref<4x128xf32, #tpu.memory_space<vmem>>, vector<1x128xf32>
    %64 = arith.addf %57, %62 : vector<16x128xf32>
    %65 = vector.broadcast %63 : vector<1x128xf32> to vector<16x128xf32>
    %66 = arith.mulf %62, %65 : vector<16x128xf32>
    %67 = arith.addf %60, %66 : vector<16x128xf32>
    %68 = arith.divf %67, %64 : vector<16x128xf32>
    %69 = arith.mulf %12, %68 : vector<16x128xf32>
    %70 = arith.addf %69, %13 : vector<16x128xf32>
    %71 = math.absf %70 : vector<16x128xf32>
    %cst_27 = arith.constant 0.000000e+00 : f32
    %72 = vector.broadcast %cst_27 : f32 to vector<16x128xf32>
    %73 = arith.subf %72, %71 : vector<16x128xf32>
    %74 = math.exp %73 : vector<16x128xf32>
    %cst_28 = arith.constant 1.000000e+00 : f32
    %75 = vector.broadcast %cst_28 : f32 to vector<16x128xf32>
    %76 = arith.addf %75, %74 : vector<16x128xf32>
    %77 = math.log %76 : vector<16x128xf32>
    %cst_29 = arith.constant 1.000000e+00 : f32
    %78 = vector.broadcast %cst_29 : f32 to vector<16x128xf32>
    %79 = arith.addf %78, %74 : vector<16x128xf32>
    %cst_30 = arith.constant 1.000000e+00 : f32
    %80 = vector.broadcast %cst_30 : f32 to vector<16x128xf32>
    %81 = arith.divf %80, %79 : vector<16x128xf32>
    %cst_31 = arith.constant 0.000000e+00 : f32
    %82 = vector.broadcast %cst_31 : f32 to vector<16x128xf32>
    %83 = arith.cmpf oge, %70, %82 : vector<16x128xf32>
    %cst_32 = arith.constant 1.000000e+00 : f32
    %84 = vector.broadcast %cst_32 : f32 to vector<16x128xf32>
    %85 = arith.subf %84, %81 : vector<16x128xf32>
    %86 = arith.select %83, %81, %85 : vector<16x128xi1>, vector<16x128xf32>
    %cst_33 = arith.constant 1.000000e+02 : f32
    %87 = vector.broadcast %cst_33 : f32 to vector<16x128xf32>
    %88 = arith.mulf %12, %87 : vector<16x128xf32>
    %89 = math.log %88 : vector<16x128xf32>
    %cst_34 = arith.constant 4.60517025 : f32
    %90 = vector.broadcast %cst_34 : f32 to vector<16x128xf32>
    %91 = arith.subf %89, %90 : vector<16x128xf32>
    %cst_35 = arith.constant 2.000000e+00 : f32
    %92 = vector.broadcast %cst_35 : f32 to vector<16x128xf32>
    %93 = arith.mulf %92, %77 : vector<16x128xf32>
    %94 = arith.addf %71, %93 : vector<16x128xf32>
    %cst_36 = arith.constant 2.000000e-06 : f32
    %95 = vector.broadcast %cst_36 : f32 to vector<16x128xf32>
    %96 = arith.addf %94, %95 : vector<16x128xf32>
    %97 = arith.subf %91, %96 : vector<16x128xf32>
    %c0_37 = arith.constant 0 : index
    %c0_38 = arith.constant 0 : index
    %c0_39 = arith.constant 0 : index
    %98 = vector.load %arg4[%c0_37, %c0_38, %c0_39] : memref<4x16x1xf32, #tpu.memory_space<vmem>>, vector<4x16x1xf32>
    %99 = vector.shape_cast %14 : vector<16x128xf32> to vector<1x16x128xf32>
    %100 = vector.broadcast %98 : vector<4x16x1xf32> to vector<4x16x128xf32>
    %101 = vector.broadcast %99 : vector<1x16x128xf32> to vector<4x16x128xf32>
    %102 = arith.addf %100, %101 : vector<4x16x128xf32>
    %cst_40 = arith.constant dense<0xFF800000> : vector<4x128xf32>
    %103 = vector.multi_reduction <maximumf>, %102, %cst_40 [1] : vector<4x16x128xf32> to vector<4x128xf32>
    %104 = vector.shape_cast %103 : vector<4x128xf32> to vector<4x1x128xf32>
    %105 = vector.broadcast %104 : vector<4x1x128xf32> to vector<4x16x128xf32>
    %106 = arith.subf %102, %105 : vector<4x16x128xf32>
    %107 = math.exp %106 : vector<4x16x128xf32>
    %cst_41 = arith.constant dense<0.000000e+00> : vector<4x128xf32>
    %108 = vector.multi_reduction <add>, %107, %cst_41 [1] : vector<4x16x128xf32> to vector<4x128xf32>
    %109 = vector.shape_cast %108 : vector<4x128xf32> to vector<4x1x128xf32>
    %cst_42 = arith.constant 1.000000e+00 : f32
    %110 = vector.broadcast %cst_42 : f32 to vector<4x1x128xf32>
    %111 = arith.divf %110, %109 : vector<4x1x128xf32>
    %112 = vector.broadcast %111 : vector<4x1x128xf32> to vector<4x16x128xf32>
    %113 = arith.mulf %107, %112 : vector<4x16x128xf32>
    %114 = vector.shape_cast %86 : vector<16x128xf32> to vector<1x16x128xf32>
    %115 = vector.broadcast %114 : vector<1x16x128xf32> to vector<4x16x128xf32>
    %116 = arith.mulf %113, %115 : vector<4x16x128xf32>
    %cst_43 = arith.constant dense<0.000000e+00> : vector<4x128xf32>
    %117 = vector.multi_reduction <add>, %116, %cst_43 [1] : vector<4x16x128xf32> to vector<4x128xf32>
    %cst_44 = arith.constant 0.999998986 : f32
    %118 = vector.broadcast %cst_44 : f32 to vector<4x128xf32>
    %119 = arith.mulf %117, %118 : vector<4x128xf32>
    %cst_45 = arith.constant 5.000000e-07 : f32
    %120 = vector.broadcast %cst_45 : f32 to vector<4x128xf32>
    %121 = arith.addf %119, %120 : vector<4x128xf32>
    %cst_46 = arith.constant 1.000000e+02 : f32
    %122 = vector.broadcast %cst_46 : f32 to vector<4x128xf32>
    %123 = arith.mulf %121, %122 : vector<4x128xf32>
    %124 = math.log %123 : vector<4x128xf32>
    %cst_47 = arith.constant 4.60517025 : f32
    %125 = vector.broadcast %cst_47 : f32 to vector<4x128xf32>
    %126 = arith.subf %124, %125 : vector<4x128xf32>
    %cst_48 = arith.constant 1.000000e+00 : f32
    %127 = vector.broadcast %cst_48 : f32 to vector<4x128xf32>
    %128 = arith.subf %127, %121 : vector<4x128xf32>
    %cst_49 = arith.constant 1.000000e+02 : f32
    %129 = vector.broadcast %cst_49 : f32 to vector<4x128xf32>
    %130 = arith.mulf %128, %129 : vector<4x128xf32>
    %131 = math.log %130 : vector<4x128xf32>
    %cst_50 = arith.constant 4.60517025 : f32
    %132 = vector.broadcast %cst_50 : f32 to vector<4x128xf32>
    %133 = arith.subf %131, %132 : vector<4x128xf32>
    %134 = arith.subf %126, %133 : vector<4x128xf32>
    %cst_51 = arith.constant dense<0xFF800000> : vector<128xf32>
    %135 = vector.multi_reduction <maximumf>, %97, %cst_51 [0] : vector<16x128xf32> to vector<128xf32>
    %136 = vector.shape_cast %135 : vector<128xf32> to vector<1x128xf32>
    %137 = vector.broadcast %136 : vector<1x128xf32> to vector<16x128xf32>
    %138 = arith.subf %97, %137 : vector<16x128xf32>
    %139 = math.exp %138 : vector<16x128xf32>
    %140 = vector.shape_cast %139 : vector<16x128xf32> to vector<1x16x128xf32>
    %141 = vector.broadcast %140 : vector<1x16x128xf32> to vector<4x16x128xf32>
    %142 = arith.mulf %113, %141 : vector<4x16x128xf32>
    %cst_52 = arith.constant dense<0.000000e+00> : vector<4x128xf32>
    %143 = vector.multi_reduction <add>, %142, %cst_52 [1] : vector<4x16x128xf32> to vector<4x128xf32>
    %144 = math.log %143 : vector<4x128xf32>
    %145 = vector.broadcast %136 : vector<1x128xf32> to vector<4x128xf32>
    %146 = arith.addf %145, %144 : vector<4x128xf32>
    %147 = arith.addf %126, %133 : vector<4x128xf32>
    %cst_53 = arith.constant -1.00000045E-6 : f32
    %148 = vector.broadcast %cst_53 : f32 to vector<4x128xf32>
    %149 = arith.subf %148, %147 : vector<4x128xf32>
    %150 = arith.addf %146, %149 : vector<4x128xf32>
    %151 = tpu.concatenate %134, %150 in 0 : vector<4x128xf32>, vector<4x128xf32> -> vector<8x128xf32>
    %c0_54 = arith.constant 0 : index
    %c0_55 = arith.constant 0 : index
    %152 = vector.load %arg5[%c0_54, %c0_55] : memref<8x128xf32, #tpu.memory_space<vmem>>, vector<8x128xf32>
    tpu.vector_store %arg5[%c0_54, %c0_55], %151 {strides = array<i32>} : memref<8x128xf32, #tpu.memory_space<vmem>>, vector<8x128xf32>,
    return
  }
  func.func @transform_0(%arg0: i32) -> (i32, i32) {
    %c0_i32 = arith.constant 0 : i32
    %c0_i32_0 = arith.constant 0 : i32
    return %c0_i32, %arg0 : i32, i32
  }
  func.func @transform_1(%arg0: i32) -> (i32, i32) {
    %c0_i32 = arith.constant 0 : i32
    %c0_i32_0 = arith.constant 0 : i32
    return %c0_i32, %arg0 : i32, i32
  }
  func.func @transform_2(%arg0: i32) -> (i32, i32, i32) {
    %c0_i32 = arith.constant 0 : i32
    %c0_i32_0 = arith.constant 0 : i32
    %c0_i32_1 = arith.constant 0 : i32
    %c0_i32_2 = arith.constant 0 : i32
    return %c0_i32, %c0_i32_0, %c0_i32_1 : i32, i32, i32
  }
  func.func @transform_3(%arg0: i32) -> (i32, i32, i32) {
    %c0_i32 = arith.constant 0 : i32
    %c0_i32_0 = arith.constant 0 : i32
    %c0_i32_1 = arith.constant 0 : i32
    %c0_i32_2 = arith.constant 0 : i32
    return %c0_i32, %c0_i32_0, %c0_i32_1 : i32, i32, i32
  }
  func.func @transform_4(%arg0: i32) -> (i32, i32) {
    %c0_i32 = arith.constant 0 : i32
    %c0_i32_0 = arith.constant 0 : i32
    return %c0_i32, %arg0 : i32, i32
  }
}

</mosaic_0001>

<llo_original>
// kernel: tpu_custom_call.1
$region0: #{tpu_custom_call.1}
  #allocation0 [shape = 'u32[]', space=smem, size = 0x4, offset = 0x4, fixed_abs, tag = 'smem constant byte address 0x4 - core index']
  #allocation1 [shape = 'u32[144,128]{1,0:T(1,128)}', space=vmem, size = 0x12000, scoped, tag = 'internal scratch']
  %s0 = inlined_call_operand.vmem [shape: f32[52,128], index: 0, kind: input, shape index: {}]
  %s1 = inlined_call_operand.vmem [shape: f32[4,128], index: 1, kind: input, shape index: {}]
  %s2 = inlined_call_operand.vmem [shape: f32[4,16,1], index: 2, kind: input, shape index: {}]
  %s3 = inlined_call_operand.vmem [shape: f32[4,16,1], index: 3, kind: input, shape index: {}]
  %s4 = inlined_call_operand.hbm [shape: f32[8,128], index: 4, kind: output, shape index: {}]
  %s5 = sld [smem:[#allocation0]]
  $region26: #{tpu_custom_call.1} parent=0
    _
  %s7 = ssub.s32 1, %s5
  %s8 = scalar_select 0, %s7, %s5
  $region1: #{tpu_custom_call.1} parent=0
    #allocation2 [shape = 'u8[4096]{0}', space=vmem, size = 0x1000, scoped, tag = 'output window, operand 0, single buffered']
    #allocation3 [shape = 's32[1]{0}', space=sflag, size = 0x4, scoped, tag = 'scoped memory for tpu_custom_call.1']
    %9 = vsyncpa [#allocation3], 0
    // Predicated region
    $region2: #{tpu_custom_call.1} parent=1 // pred_check
      _
    $region3: #{tpu_custom_call.1} parent=1 // pred_check_branch
      %11 = sbr.rel (0) target = $region5
    $region4: #{tpu_custom_call.1} parent=1 // pred_region
      _
    $region5: #{tpu_custom_call.1} parent=1 // pred_fallthru
      _
    // Predicated region
    $region6: #{tpu_custom_call.1} parent=1 // pred_check
      _
    $region7: #{tpu_custom_call.1} parent=1 // pred_check_branch
      %13 = sbr.rel (0) target = $region9
    $region8: #{tpu_custom_call.1} parent=1 // pred_region
      _
    $region9: #{tpu_custom_call.1} parent=1 // pred_fallthru
      _
    // Predicated region
    $region10: #{tpu_custom_call.1} parent=1 // pred_check
      _
    $region11: #{tpu_custom_call.1} parent=1 // pred_check_branch
      %15 = sbr.rel (0) target = $region13
    $region12: #{tpu_custom_call.1} parent=1 // pred_region
      _
    $region13: #{tpu_custom_call.1} parent=1 // pred_fallthru
      _
    // Predicated region
    $region14: #{tpu_custom_call.1} parent=1 // pred_check
      _
    $region15: #{tpu_custom_call.1} parent=1 // pred_check_branch
      %17 = sbr.rel (0) target = $region17
    $region16: #{tpu_custom_call.1} parent=1 // pred_region
      _
    $region17: #{tpu_custom_call.1} parent=1 // pred_fallthru
      _
    %v18 = vld [vmem:[%s0] sm:$0xff]
    %v19 = vld [vmem:[%s0 + $0x8] sm:$0xff]
    %v20 = vadd.f32 %v18, 0.54132324
    %v21 = vadd.f32 %v19, 0.54132324
    %v22 = vmax.f32 %v20, 0.0
    %v23 = vmax.f32 %v21, 0.0
    %v24 = vand.u32 2147483647, %v20
    %v25 = vand.u32 2147483647, %v21
    %v26 = vsub.f32 0.0, %v24
    %v27 = vsub.f32 0.0, %v25
    %v28 = vmul.f32 %v26, 1.442695
    %v29 = vpow.pop %v28
    %v30 = vmul.f32 %v27, 1.442695
    %v31 = vpow.pop %v30
    %v32 = vadd.f32 %v29, 1.0
    %v33 = vadd.f32 %v31, 1.0
    %v34 = vlog2.pop %v32
    %v35 = vmul.f32 %v34, 0.6931472
    %v36 = vlog2.pop %v33
    %v37 = vmul.f32 %v36, 0.6931472
    %v38 = vadd.f32 %v22, %v35
    %v39 = vadd.f32 %v23, %v37
    %v40 = vld [vmem:[%s0 + $0x10] sm:$0xff]
    %v41 = vld [vmem:[%s0 + $0x18] sm:$0xff]
    %v42 = vld [vmem:[%s0 + $0x20] sm:$0xff]
    %v43 = vld [vmem:[%s0 + $0x28] sm:$0xff]
    %v44 = vld [vmem:[%s2] sm:$0xff]
    %v45 = vld [vmem:[%s2 + $0x8] sm:$0xff]
    %v46 = vld [vmem:[%s0 + $0x30] sm:$0x1]
    %48 = vset.pattern.permute.xlu0 0
    %49 = vperm.xlu0 %48, %v44
    %v50 = vpop.permute.xlu0 %49
    %53 = vset.pattern.permute.xlu0 0
    %54 = vperm.xlu0 %53, %v45
    %v55 = vpop.permute.xlu0 %54
    %v57 = vlaneseq
    %v58 = vshrl.u32 %v57, 7
    %v59 = vsub.s32 0, %v58
    %v60 = vrot.slane %v46, %v59
    %v61 = vadd.f32 %v50, %v60
    %v62 = vadd.f32 %v55, %v60
    %s63 = scalar_lea.vmem %s2, 16
    %v64 = vld [vmem:[%s63] sm:$0xff]
    %v65 = vld [vmem:[%s63 + $0x8] sm:$0xff]
    %v66 = vld [vmem:[%s0 + $0x31] sm:$0x1]
    %68 = vset.pattern.permute.xlu0 0
    %69 = vperm.xlu0 %68, %v64
    %v70 = vpop.permute.xlu0 %69
    %73 = vset.pattern.permute.xlu0 0
    %74 = vperm.xlu0 %73, %v65
    %v75 = vpop.permute.xlu0 %74
    %v77 = vlaneseq
    %v78 = vshrl.u32 %v77, 7
    %v79 = vsub.s32 0, %v78
    %v80 = vrot.slane %v66, %v79
    %v81 = vadd.f32 %v70, %v80
    %v82 = vadd.f32 %v75, %v80
    %s83 = scalar_lea.vmem %s2, 32
    %v84 = vld [vmem:[%s83] sm:$0xff]
    %v85 = vld [vmem:[%s83 + $0x8] sm:$0xff]
    %v86 = vld [vmem:[%s0 + $0x32] sm:$0x1]
    %88 = vset.pattern.permute.xlu0 0
    %89 = vperm.xlu0 %88, %v84
    %v90 = vpop.permute.xlu0 %89
    %93 = vset.pattern.permute.xlu0 0
    %94 = vperm.xlu0 %93, %v85
    %v95 = vpop.permute.xlu0 %94
    %v97 = vlaneseq
    %v98 = vshrl.u32 %v97, 7
    %v99 = vsub.s32 0, %v98
    %v100 = vrot.slane %v86, %v99
    %v101 = vadd.f32 %v90, %v100
    %v102 = vadd.f32 %v95, %v100
    %s103 = scalar_lea.vmem %s2, 48
    %v104 = vld [vmem:[%s103] sm:$0xff]
    %v105 = vld [vmem:[%s103 + $0x8] sm:$0xff]
    %v106 = vld [vmem:[%s0 + $0x33] sm:$0x1]
    %108 = vset.pattern.permute.xlu0 0
    %109 = vperm.xlu0 %108, %v104
    %v110 = vpop.permute.xlu0 %109
    %113 = vset.pattern.permute.xlu0 0
    %114 = vperm.xlu0 %113, %v105
    %v115 = vpop.permute.xlu0 %114
    %v117 = vlaneseq
    %v118 = vshrl.u32 %v117, 7
    %v119 = vsub.s32 0, %v118
    %v120 = vrot.slane %v106, %v119
    %v121 = vadd.f32 %v110, %v120
    %v122 = vadd.f32 %v115, %v120
    %v123 = vmax.f32 %v61, %v81
    %v124 = vmax.f32 %v62, %v82
    %v125 = vmax.f32 %v123, %v101
    %v126 = vmax.f32 %v124, %v102
    %v127 = vmax.f32 %v125, %v121
    %v128 = vmax.f32 %v126, %v122
    %v129 = vsub.f32 %v61, %v127
    %v130 = vsub.f32 %v62, %v128
    %v131 = vmul.f32 %v129, 1.442695
    %v132 = vpow.pop %v131
    %v133 = vmul.f32 %v130, 1.442695
    %v134 = vpow.pop %v133
    %v135 = vld [vmem:[%s1] sm:$0x1]
    %v136 = vlaneseq
    %v137 = vshrl.u32 %v136, 7
    %v138 = vsub.s32 0, %v137
    %v139 = vrot.slane %v135, %v138
    %v140 = vmul.f32 %v132, %v139
    %v141 = vmul.f32 %v134, %v139
    %v142 = vsub.f32 %v81, %v127
    %v143 = vsub.f32 %v82, %v128
    %v144 = vmul.f32 %v142, 1.442695
    %v145 = vpow.pop %v144
    %v146 = vmul.f32 %v143, 1.442695
    %v147 = vpow.pop %v146
    %v148 = vld [vmem:[%s1 + $0x1] sm:$0x1]
    %v149 = vadd.f32 %v132, %v145
    %v150 = vadd.f32 %v134, %v147
    %v151 = vlaneseq
    %v152 = vshrl.u32 %v151, 7
    %v153 = vsub.s32 0, %v152
    %v154 = vrot.slane %v148, %v153
    %v155 = vmul.f32 %v145, %v154
    %v156 = vmul.f32 %v147, %v154
    %v157 = vadd.f32 %v140, %v155
    %v158 = vadd.f32 %v141, %v156
    %v159 = vsub.f32 %v101, %v127
    %v160 = vsub.f32 %v102, %v128
    %v161 = vmul.f32 %v159, 1.442695
    %v162 = vpow.pop %v161
    %v163 = vmul.f32 %v160, 1.442695
    %v164 = vpow.pop %v163
    %v165 = vld [vmem:[%s1 + $0x2] sm:$0x1]
    %v166 = vadd.f32 %v149, %v162
    %v167 = vadd.f32 %v150, %v164
    %v168 = vlaneseq
    %v169 = vshrl.u32 %v168, 7
    %v170 = vsub.s32 0, %v169
    %v171 = vrot.slane %v165, %v170
    %v172 = vmul.f32 %v162, %v171
    %v173 = vmul.f32 %v164, %v171
    %v174 = vadd.f32 %v157, %v172
    %v175 = vadd.f32 %v158, %v173
    %v176 = vsub.f32 %v121, %v127
    %v177 = vsub.f32 %v122, %v128
    %v178 = vmul.f32 %v176, 1.442695
    %v179 = vpow.pop %v178
    %v180 = vmul.f32 %v177, 1.442695
    %v181 = vpow.pop %v180
    %v182 = vld [vmem:[%s1 + $0x3] sm:$0x1]
    %v183 = vadd.f32 %v166, %v179
    %v184 = vadd.f32 %v167, %v181
    %v185 = vlaneseq
    %v186 = vshrl.u32 %v185, 7
    %v187 = vsub.s32 0, %v186
    %v188 = vrot.slane %v182, %v187
    %v189 = vmul.f32 %v179, %v188
    %v190 = vmul.f32 %v181, %v188
    %v191 = vadd.f32 %v174, %v189
    %v192 = vadd.f32 %v175, %v190
    %v193 = vrcp.pop %v183
    %v194 = vmul.f32 %v191, %v193
    %v195 = vrcp.pop %v184
    %v196 = vmul.f32 %v192, %v195
    %v197 = vmul.f32 %v38, %v194
    %v198 = vmul.f32 %v39, %v196
    %v199 = vadd.f32 %v197, %v40
    %v200 = vadd.f32 %v198, %v41
    %v201 = vand.u32 2147483647, %v199
    %v202 = vand.u32 2147483647, %v200
    %v203 = vsub.f32 0.0, %v201
    %v204 = vsub.f32 0.0, %v202
    %v205 = vmul.f32 %v203, 1.442695
    %v206 = vpow.pop %v205
    %v207 = vmul.f32 %v204, 1.442695
    %v208 = vpow.pop %v207
    %v209 = vadd.f32 %v206, 1.0
    %v210 = vadd.f32 %v208, 1.0
    %v211 = vlog2.pop %v209
    %v212 = vmul.f32 %v211, 0.6931472
    %v213 = vlog2.pop %v210
    %v214 = vmul.f32 %v213, 0.6931472
    %v215 = vrcp.pop %v209
    %v216 = vmul.f32 1.0, %v215
    %v217 = vrcp.pop %v210
    %v218 = vmul.f32 1.0, %v217
    %vm219 = vcmp.ge.f32.partialorder %v199, 0.0
    %vm220 = vcmp.ge.f32.partialorder %v200, 0.0
    %v221 = vsub.f32 1.0, %v216
    %v222 = vsub.f32 1.0, %v218
    %v223 = vsel %vm219, %v216, %v221
    %v224 = vsel %vm220, %v218, %v222
    %v225 = vmul.f32 %v38, 100.0
    %v226 = vmul.f32 %v39, 100.0
    %v227 = vlog2.pop %v225
    %v228 = vmul.f32 %v227, 0.6931472
    %v229 = vlog2.pop %v226
    %v230 = vmul.f32 %v229, 0.6931472
    %v231 = vsub.f32 %v228, 4.6051702
    %v232 = vsub.f32 %v230, 4.6051702
    %v233 = vmul.f32 %v212, 2.0
    %v234 = vmul.f32 %v214, 2.0
    %v235 = vadd.f32 %v201, %v233
    %v236 = vadd.f32 %v202, %v234
    %v237 = vadd.f32 %v235, 2e-06
    %v238 = vadd.f32 %v236, 2e-06
    %v239 = vsub.f32 %v231, %v237
    %v240 = vsub.f32 %v232, %v238
    %v241 = vld [vmem:[%s3] sm:$0xff]
    %v242 = vld [vmem:[%s3 + $0x8] sm:$0xff]
    %v243 = vld [vmem:[%s3 + $0x10] sm:$0xff]
    %v244 = vld [vmem:[%s3 + $0x18] sm:$0xff]
    %v245 = vld [vmem:[%s3 + $0x20] sm:$0xff]
    %v246 = vld [vmem:[%s3 + $0x28] sm:$0xff]
    %v247 = vld [vmem:[%s3 + $0x30] sm:$0xff]
    %v248 = vld [vmem:[%s3 + $0x38] sm:$0xff]
    %250 = vset.pattern.permute.xlu0 0
    %251 = vperm.xlu0 %250, %v241
    %v252 = vpop.permute.xlu0 %251
    %255 = vset.pattern.permute.xlu0 0
    %256 = vperm.xlu0 %255, %v242
    %v257 = vpop.permute.xlu0 %256
    %260 = vset.pattern.permute.xlu0 0
    %261 = vperm.xlu0 %260, %v243
    %v262 = vpop.permute.xlu0 %261
    %265 = vset.pattern.permute.xlu0 0
    %266 = vperm.xlu0 %265, %v244
    %v267 = vpop.permute.xlu0 %266
    %270 = vset.pattern.permute.xlu0 0
    %271 = vperm.xlu0 %270, %v245
    %v272 = vpop.permute.xlu0 %271
    %275 = vset.pattern.permute.xlu0 0
    %276 = vperm.xlu0 %275, %v246
    %v277 = vpop.permute.xlu0 %276
    %280 = vset.pattern.permute.xlu0 0
    %281 = vperm.xlu0 %280, %v247
    %v282 = vpop.permute.xlu0 %281
    %285 = vset.pattern.permute.xlu0 0
    %286 = vperm.xlu0 %285, %v248
    %v287 = vpop.permute.xlu0 %286
    %v289 = vadd.f32 %v252, %v42
    %v290 = vadd.f32 %v257, %v43
    %v291 = vadd.f32 %v262, %v42
    %v292 = vadd.f32 %v267, %v43
    %v293 = vadd.f32 %v272, %v42
    %v294 = vadd.f32 %v277, %v43
    %v295 = vadd.f32 %v282, %v42
    %v296 = vadd.f32 %v287, %v43
    %v297 = vmax.f32 %v289, %v290
    %v298 = vrot.slane %v297, 4
    %v299 = vmax.f32 %v297, %v298
    %v300 = vrot.slane %v299, 2
    %v301 = vmax.f32 %v299, %v300
    %v302 = vrot.slane %v301, 1
    %v303 = vmax.f32 %v301, %v302
    %v304 = vmax.f32 %v291, %v292
    %v305 = vrot.slane %v304, 4
    %v306 = vmax.f32 %v304, %v305
    %v307 = vrot.slane %v306, 2
    %v308 = vmax.f32 %v306, %v307
    %v309 = vrot.slane %v308, 1
    %v310 = vmax.f32 %v308, %v309
    %v311 = vmax.f32 %v293, %v294
    %v312 = vrot.slane %v311, 4
    %v313 = vmax.f32 %v311, %v312
    %v314 = vrot.slane %v313, 2
    %v315 = vmax.f32 %v313, %v314
    %v316 = vrot.slane %v315, 1
    %v317 = vmax.f32 %v315, %v316
    %v318 = vmax.f32 %v295, %v296
    %v319 = vrot.slane %v318, 4
    %v320 = vmax.f32 %v318, %v319
    %v321 = vrot.slane %v320, 2
    %v322 = vmax.f32 %v320, %v321
    %v323 = vrot.slane %v322, 1
    %v324 = vmax.f32 %v322, %v323
    %v325 = vsub.f32 %v289, %v303
    %v326 = vsub.f32 %v290, %v303
    %v327 = vsub.f32 %v291, %v310
    %v328 = vsub.f32 %v292, %v310
    %v329 = vsub.f32 %v293, %v317
    %v330 = vsub.f32 %v294, %v317
    %v331 = vsub.f32 %v295, %v324
    %v332 = vsub.f32 %v296, %v324
    %v333 = vmul.f32 %v325, 1.442695
    %v334 = vpow.pop %v333
    %v335 = vmul.f32 %v326, 1.442695
    %v336 = vpow.pop %v335
    %v337 = vmul.f32 %v327, 1.442695
    %v338 = vpow.pop %v337
    %v339 = vmul.f32 %v328, 1.442695
    %v340 = vpow.pop %v339
    %v341 = vmul.f32 %v329, 1.442695
    %v342 = vpow.pop %v341
    %v343 = vmul.f32 %v330, 1.442695
    %v344 = vpow.pop %v343
    %v345 = vmul.f32 %v331, 1.442695
    %v346 = vpow.pop %v345
    %v347 = vmul.f32 %v332, 1.442695
    %v348 = vpow.pop %v347
    %v349 = vadd.f32 %v334, %v336
    %v350 = vrot.slane %v349, 4
    %v351 = vadd.f32 %v349, %v350
    %v352 = vrot.slane %v351, 2
    %v353 = vadd.f32 %v351, %v352
    %v354 = vrot.slane %v353, 1
    %v355 = vadd.f32 %v353, %v354
    %v356 = vadd.f32 %v338, %v340
    %v357 = vrot.slane %v356, 4
    %v358 = vadd.f32 %v356, %v357
    %v359 = vrot.slane %v358, 2
    %v360 = vadd.f32 %v358, %v359
    %v361 = vrot.slane %v360, 1
    %v362 = vadd.f32 %v360, %v361
    %v363 = vadd.f32 %v342, %v344
    %v364 = vrot.slane %v363, 4
    %v365 = vadd.f32 %v363, %v364
    %v366 = vrot.slane %v365, 2
    %v367 = vadd.f32 %v365, %v366
    %v368 = vrot.slane %v367, 1
    %v369 = vadd.f32 %v367, %v368
    %v370 = vadd.f32 %v346, %v348
    %v371 = vrot.slane %v370, 4
    %v372 = vadd.f32 %v370, %v371
    %v373 = vrot.slane %v372, 2
    %v374 = vadd.f32 %v372, %v373
    %v375 = vrot.slane %v374, 1
    %v376 = vadd.f32 %v374, %v375
    %v377 = vrcp.pop %v355
    %v378 = vmul.f32 1.0, %v377
    %v379 = vrcp.pop %v362
    %v380 = vmul.f32 1.0, %v379
    %v381 = vrcp.pop %v369
    %v382 = vmul.f32 1.0, %v381
    %v383 = vrcp.pop %v376
    %v384 = vmul.f32 1.0, %v383
    %v385 = vmul.f32 %v334, %v378
    %v386 = vmul.f32 %v336, %v378
    %v387 = vmul.f32 %v338, %v380
    %v388 = vmul.f32 %v340, %v380
    %v389 = vmul.f32 %v342, %v382
    %v390 = vmul.f32 %v344, %v382
    %v391 = vmul.f32 %v346, %v384
    %v392 = vmul.f32 %v348, %v384
    %v393 = vmul.f32 %v385, %v223
    %v394 = vmul.f32 %v386, %v224
    %v395 = vmul.f32 %v387, %v223
    %v396 = vmul.f32 %v388, %v224
    %v397 = vmul.f32 %v389, %v223
    %v398 = vmul.f32 %v390, %v224
    %v399 = vmul.f32 %v391, %v223
    %v400 = vmul.f32 %v392, %v224
    %v401 = vadd.f32 %v393, %v394
    %v402 = vrot.slane %v401, 4
    %v403 = vadd.f32 %v401, %v402
    %v404 = vrot.slane %v403, 2
    %v405 = vadd.f32 %v403, %v404
    %v406 = vrot.slane %v405, 1
    %v407 = vadd.f32 %v405, %v406
    %v408 = vadd.f32 %v395, %v396
    %v409 = vrot.slane %v408, 4
    %v410 = vadd.f32 %v408, %v409
    %v411 = vrot.slane %v410, 2
    %v412 = vadd.f32 %v410, %v411
    %v413 = vrot.slane %v412, 1
    %v414 = vadd.f32 %v412, %v413
    %v415 = vadd.f32 %v397, %v398
    %v416 = vrot.slane %v415, 4
    %v417 = vadd.f32 %v415, %v416
    %v418 = vrot.slane %v417, 2
    %v419 = vadd.f32 %v417, %v418
    %v420 = vrot.slane %v419, 1
    %v421 = vadd.f32 %v419, %v420
    %v422 = vadd.f32 %v399, %v400
    %v423 = vrot.slane %v422, 4
    %v424 = vadd.f32 %v422, %v423
    %v425 = vrot.slane %v424, 2
    %v426 = vadd.f32 %v424, %v425
    %v427 = vrot.slane %v426, 1
    %v428 = vadd.f32 %v426, %v427
    %v429 = vmul.f32 %v407, 0.999999
    %v430 = vmul.f32 %v414, 0.999999
    %v431 = vmul.f32 %v421, 0.999999
    %v432 = vmul.f32 %v428, 0.999999
    %v433 = vadd.f32 %v429, 5e-07
    %v434 = vadd.f32 %v430, 5e-07
    %v435 = vadd.f32 %v431, 5e-07
    %v436 = vadd.f32 %v432, 5e-07
    %v437 = vmul.f32 %v433, 100.0
    %v438 = vmul.f32 %v434, 100.0
    %v439 = vmul.f32 %v435, 100.0
    %v440 = vmul.f32 %v436, 100.0
    %v441 = vlog2.pop %v437
    %v442 = vmul.f32 %v441, 0.6931472
    %v443 = vlog2.pop %v438
    %v444 = vmul.f32 %v443, 0.6931472
    %v445 = vlog2.pop %v439
    %v446 = vmul.f32 %v445, 0.6931472
    %v447 = vlog2.pop %v440
    %v448 = vmul.f32 %v447, 0.6931472
    %v449 = vsub.f32 %v442, 4.6051702
    %v450 = vsub.f32 %v444, 4.6051702
    %v451 = vsub.f32 %v446, 4.6051702
    %v452 = vsub.f32 %v448, 4.6051702
    %v453 = vsub.f32 1.0, %v433
    %v454 = vsub.f32 1.0, %v434
    %v455 = vsub.f32 1.0, %v435
    %v456 = vsub.f32 1.0, %v436
    %v457 = vmul.f32 %v453, 100.0
    %v458 = vmul.f32 %v454, 100.0
    %v459 = vmul.f32 %v455, 100.0
    %v460 = vmul.f32 %v456, 100.0
    %v461 = vlog2.pop %v457
    %v462 = vmul.f32 %v461, 0.6931472
    %v463 = vlog2.pop %v458
    %v464 = vmul.f32 %v463, 0.6931472
    %v465 = vlog2.pop %v459
    %v466 = vmul.f32 %v465, 0.6931472
    %v467 = vlog2.pop %v460
    %v468 = vmul.f32 %v467, 0.6931472
    %v469 = vsub.f32 %v462, 4.6051702
    %v470 = vsub.f32 %v464, 4.6051702
    %v471 = vsub.f32 %v466, 4.6051702
    %v472 = vsub.f32 %v468, 4.6051702
    %v473 = vsub.f32 %v449, %v469
    %v474 = vsub.f32 %v450, %v470
    %v475 = vsub.f32 %v451, %v471
    %v476 = vsub.f32 %v452, %v472
    %v477 = vmax.f32 %v239, %v240
    %v478 = vrot.slane %v477, 4
    %v479 = vmax.f32 %v477, %v478
    %v480 = vrot.slane %v479, 2
    %v481 = vmax.f32 %v479, %v480
    %v482 = vrot.slane %v481, 1
    %v483 = vmax.f32 %v481, %v482
    %v484 = vsub.f32 %v239, %v483
    %v485 = vsub.f32 %v240, %v483
    %v486 = vmul.f32 %v484, 1.442695
    %v487 = vpow.pop %v486
    %v488 = vmul.f32 %v485, 1.442695
    %v489 = vpow.pop %v488
    %v490 = vmul.f32 %v385, %v487
    %v491 = vmul.f32 %v386, %v489
    %v492 = vmul.f32 %v387, %v487
    %v493 = vmul.f32 %v388, %v489
    %v494 = vmul.f32 %v389, %v487
    %v495 = vmul.f32 %v390, %v489
    %v496 = vmul.f32 %v391, %v487
    %v497 = vmul.f32 %v392, %v489
    %v498 = vadd.f32 %v490, %v491
    %v499 = vrot.slane %v498, 4
    %v500 = vadd.f32 %v498, %v499
    %v501 = vrot.slane %v500, 2
    %v502 = vadd.f32 %v500, %v501
    %v503 = vrot.slane %v502, 1
    %v504 = vadd.f32 %v502, %v503
    %v505 = vadd.f32 %v492, %v493
    %v506 = vrot.slane %v505, 4
    %v507 = vadd.f32 %v505, %v506
    %v508 = vrot.slane %v507, 2
    %v509 = vadd.f32 %v507, %v508
    %v510 = vrot.slane %v509, 1
    %v511 = vadd.f32 %v509, %v510
    %v512 = vadd.f32 %v494, %v495
    %v513 = vrot.slane %v512, 4
    %v514 = vadd.f32 %v512, %v513
    %v515 = vrot.slane %v514, 2
    %v516 = vadd.f32 %v514, %v515
    %v517 = vrot.slane %v516, 1
    %v518 = vadd.f32 %v516, %v517
    %v519 = vadd.f32 %v496, %v497
    %v520 = vrot.slane %v519, 4
    %v521 = vadd.f32 %v519, %v520
    %v522 = vrot.slane %v521, 2
    %v523 = vadd.f32 %v521, %v522
    %v524 = vrot.slane %v523, 1
    %v525 = vadd.f32 %v523, %v524
    %v526 = vlog2.pop %v504
    %v527 = vmul.f32 %v526, 0.6931472
    %v528 = vlog2.pop %v511
    %v529 = vmul.f32 %v528, 0.6931472
    %v530 = vlog2.pop %v518
    %v531 = vmul.f32 %v530, 0.6931472
    %v532 = vlog2.pop %v525
    %v533 = vmul.f32 %v532, 0.6931472
    %vm538 = vcmask 1041409
    %v539 = vsel %vm538, %v529, %v527
    %vm540 = vcmask 1042434
    %v541 = vsel %vm540, %v531, %v539
    %vm542 = vcmask 1043459
    %v543 = vsel %vm542, %v533, %v541
    %v545 = vadd.f32 %v483, %v543
    %v546 = vadd.f32 %v449, %v469
    %v547 = vadd.f32 %v450, %v470
    %v548 = vadd.f32 %v451, %v471
    %v549 = vadd.f32 %v452, %v472
    %v550 = vsub.f32 -1.0000005e-06, %v546
    %v551 = vsub.f32 -1.0000005e-06, %v547
    %v552 = vsub.f32 -1.0000005e-06, %v548
    %v553 = vsub.f32 -1.0000005e-06, %v549
    %v558 = vsel %vm538, %v551, %v550
    %v559 = vsel %vm540, %v552, %v558
    %v560 = vsel %vm542, %v553, %v559
    %v562 = vadd.f32 %v545, %v560
    %v567 = vsel %vm538, %v474, %v473
    %v568 = vsel %vm540, %v475, %v567
    %v569 = vsel %vm542, %v476, %v568
    %v572 = vrot.slane %v562, 4
    %vm574 = vcmask 1043456
    %v575 = vsel %vm574, %v569, %v572
    %576 = vst [vmem:[#allocation2] sm:$0xff] %v575
    // Predicated region
    $region18: #{tpu_custom_call.1} parent=1 // pred_check
      _
    $region19: #{tpu_custom_call.1} parent=1 // pred_check_branch
      %578 = sbr.rel (0) target = $region21
    $region20: #{tpu_custom_call.1} parent=1 // pred_region
      %s580 = ssub.s32 128, 128
      %581 = vsyncadd [#allocation3], %s580
      %s583 = sshll.u32 [#allocation2], 4
      %s584 = int_to_ptr.vmem [resolvable:$true] %s583
      %586 = dma.vmem_to_hbm [thread:$0]  %s584, 128, %s4, [#allocation3]
    $region21: #{tpu_custom_call.1} parent=1 // pred_fallthru
      _
    // Predicated region
    $region22: #{tpu_custom_call.1} parent=1 // pred_check
      _
    $region23: #{tpu_custom_call.1} parent=1 // pred_check_branch
      %588 = sbr.rel (0) target = $region25
    $region24: #{tpu_custom_call.1} parent=1 // pred_region
      %589 = dma.done [#allocation3], 128
    $region25: #{tpu_custom_call.1} parent=1 // pred_fallthru
      _
    %590 = vsyncpa [#allocation3], 1

</llo_original>
